<compile_context>
chip_gen: v7x
topology: tpu7x:2x2x1
jax: 0.10.0
libtpu: 0.0.40
codegen_flags: <defaults>
</compile_context>

<pallas_src>
import functools

import jax
import jax.numpy as jnp
from jax.experimental import pallas as pl
from jax.experimental.pallas import tpu as pltpu


def _mlp_kernel(x_ref, w1t_ref, b1_ref, w2t_ref, b2_ref, o_ref):
    # x_ref: (IN, TM) -- rows of the original input live on the lane axis.
    x = x_ref[...]
    # (H, IN) @ (IN, TM) -> (H, TM); lane-dense, MXU N-dim = TM.
    h = jnp.dot(w1t_ref[...], x, preferred_element_type=jnp.float32)
    h = jnp.maximum(h + b1_ref[...], 0.0)            # bias (H, 1) broadcasts on lanes
    # (OUT, H) @ (H, TM) -> (OUT, TM); lane-dense output -> unmasked vst.
    o = jnp.dot(w2t_ref[...], h, preferred_element_type=jnp.float32)
    o_ref[...] = jnp.maximum(o + b2_ref[...], 0.0).astype(o_ref.dtype)


def _pick_block_rows(n):
    # Rows are on the lane axis -> tile must be a multiple of 128.
    # Aim for >=4 grid steps for large N, cap at 4096 to bound padding waste
    # and VMEM.  Trace-time Python (n is a static shape).
    tgt = pl.cdiv(n, 4)
    tgt = pl.cdiv(tgt, 128) * 128
    return max(128, min(4096, tgt))


def _reference(x, w1, b1, w2, b2):
    h = jnp.maximum(x @ w1 + b1, 0.0)
    return jnp.maximum(h @ w2 + b2, 0.0)


@functools.partial(jax.jit, static_argnames=("block_rows", "use_pallas"))
def bbox_feature_extractor(bbox_features, w1, b1, w2, b2, *,
                           block_rows=None, use_pallas=None):
    """Pallas implementation of BboxFeatureExtractor.forward (activation=ReLU).

    bbox_features: [..., input_size] float
    w1: [input_size, hidden], b1: [hidden]   (torch input_layer.weight.T / .bias)
    w2: [hidden, output],     b2: [output]   (torch output_layer.weight.T / .bias)
    returns: [..., output] float32
    """
    in_size = bbox_features.shape[-1]
    hidden = w1.shape[1]
    out_size = w2.shape[1]

    lead_shape = bbox_features.shape[:-1]
    x2d = bbox_features.reshape(-1, in_size).astype(jnp.float32)
    n = x2d.shape[0]

    # For tiny N the kernel launch/pipeline overhead dominates -> pure JAX.
    if use_pallas is None:
        use_pallas = n >= 512
    if not use_pallas:
        out = _reference(x2d, w1.astype(jnp.float32), b1.astype(jnp.float32),
                         w2.astype(jnp.float32), b2.astype(jnp.float32))
        return out.reshape(*lead_shape, out_size)

    if block_rows is None:
        block_rows = _pick_block_rows(n)

    # Transpose once in the wrapper: rows -> lane axis (layout plumbing).
    x_t = x2d.T                                              # (IN, N)
    n_pad = pl.cdiv(n, block_rows) * block_rows
    if n_pad != n:
        x_t = jnp.pad(x_t, ((0, 0), (0, n_pad - n)))         # padded cols sliced off later

    # Weights transposed so the kernel does Wᵀ·X; biases as column vectors.
    w1t = w1.T.astype(jnp.float32)                           # (H, IN)
    w2t = w2.T.astype(jnp.float32)                           # (OUT, H)
    b1_c = b1.reshape(hidden, 1).astype(jnp.float32)
    b2_c = b2.reshape(out_size, 1).astype(jnp.float32)

    grid = (n_pad // block_rows,)

    out_t = pl.pallas_call(
        _mlp_kernel,
        out_shape=jax.ShapeDtypeStruct((out_size, n_pad), jnp.float32),
        grid_spec=pltpu.PrefetchScalarGridSpec(
            num_scalar_prefetch=0,
            grid=grid,
            in_specs=[
                # x: full feature dim (== array dim), tiled over rows (lanes).
                pl.BlockSpec((in_size, block_rows), lambda i: (0, i)),
                # weights / biases: whole (tiny) arrays resident in VMEM.
                pl.BlockSpec((hidden, in_size), lambda i: (0, 0)),
                pl.BlockSpec((hidden, 1), lambda i: (0, 0)),
                pl.BlockSpec((out_size, hidden), lambda i: (0, 0)),
                pl.BlockSpec((out_size, 1), lambda i: (0, 0)),
            ],
            out_specs=pl.BlockSpec((out_size, block_rows), lambda i: (0, i)),
        ),
        compiler_params=pltpu.CompilerParams(
            dimension_semantics=("parallel",)),
    )(x_t, w1t, b1_c, w2t, b2_c)

    out = out_t[:, :n].T                                     # (N, OUT)
    return out.reshape(*lead_shape, out_size)


if __name__ == "__main__":
    # Module defaults: input_size=5, hidden_size=64, output_size=16.
    input_size, hidden_size, output_size = 5, 64, 16

    key = jax.random.PRNGKey(0)
    kx, k1, k2, k3, k4, ky = jax.random.split(key, 6)

    # Deterministic synthetic parameters (torch Linear W is [out,in]; stored here as [in,out]).
    w1 = jax.random.normal(k1, (input_size, hidden_size), jnp.float32) * 0.1
    b1 = jax.random.normal(k2, (hidden_size,), jnp.float32) * 0.1
    w2 = jax.random.normal(k3, (hidden_size, output_size), jnp.float32) * 0.1
    b2 = jax.random.normal(k4, (output_size,), jnp.float32) * 0.1

    # Small case (bbox features per document: [batch, seq, 5]); force the Pallas path.
    batch, seq = 2, 8
    bbox_small = jax.random.normal(kx, (batch, seq, input_size), jnp.float32)
    out_small = bbox_feature_extractor(bbox_small, w1, b1, w2, b2, use_pallas=True)
    out_small = jax.block_until_ready(out_small)
    ref_small = _reference(bbox_small, w1, b1, w2, b2)
    assert out_small.shape == (batch, seq, output_size), out_small.shape
    assert jnp.allclose(out_small, ref_small, atol=1e-5, rtol=1e-5), "small-case mismatch"

    # Larger case: exercises padding + multi-step grid via auto dispatch.
    bbox_big = jax.random.normal(ky, (2, 300, input_size), jnp.float32)
    out_big = jax.block_until_ready(
        bbox_feature_extractor(bbox_big, w1, b1, w2, b2, use_pallas=True))
    ref_big = _reference(bbox_big, w1, b1, w2, b2)
    assert out_big.shape == (2, 300, output_size), out_big.shape
    assert jnp.allclose(out_big, ref_big, atol=1e-5, rtol=1e-5), "big-case mismatch"

    print("KERNEL_OK")
</pallas_src>

<mosaic_0001>
module attributes {stable_mosaic.version = 11 : i64} {
  func.func @_mlp_kernel(%arg0: i32, %arg1: memref<5x128xf32, #tpu.memory_space<vmem>>, %arg2: memref<64x5xf32, #tpu.memory_space<vmem>>, %arg3: memref<64x1xf32, #tpu.memory_space<vmem>>, %arg4: memref<16x64xf32, #tpu.memory_space<vmem>>, %arg5: memref<16x1xf32, #tpu.memory_space<vmem>>, %arg6: memref<16x128xf32, #tpu.memory_space<vmem>>) attributes {dimension_semantics = [#tpu.dimension_semantics<parallel>], iteration_bounds = array<i64: 1>, scalar_prefetch = 0 : i64, scratch_operands = 0 : i64, tpu.core_type = #tpu.core_type<tc>, window_params = [{transform_indices = @transform_0, window_bounds = array<i64: 5, 128>}, {pipeline_mode = #tpu.pipeline_mode<synchronous>, transform_indices = @transform_1, window_bounds = array<i64: 64, 5>}, {pipeline_mode = #tpu.pipeline_mode<synchronous>, transform_indices = @transform_2, window_bounds = array<i64: 64, 1>}, {pipeline_mode = #tpu.pipeline_mode<synchronous>, transform_indices = @transform_3, window_bounds = array<i64: 16, 64>}, {pipeline_mode = #tpu.pipeline_mode<synchronous>, transform_indices = @transform_4, window_bounds = array<i64: 16, 1>}, {transform_indices = @transform_5, window_bounds = array<i64: 16, 128>}]} {
    %c0 = arith.constant 0 : index
    %c0_0 = arith.constant 0 : index
    %0 = vector.load %arg1[%c0, %c0_0] : memref<5x128xf32, #tpu.memory_space<vmem>>, vector<5x128xf32>
    %c0_1 = arith.constant 0 : index
    %c0_2 = arith.constant 0 : index
    %1 = vector.load %arg2[%c0_1, %c0_2] : memref<64x5xf32, #tpu.memory_space<vmem>>, vector<64x5xf32>
    %cst = arith.constant dense<0.000000e+00> : vector<64x128xf32>
    %2 = tpu.matmul %1, %0, %cst {dimension_numbers = #tpu.dot_dimension_numbers<[1], [0], [0], [1], [0, 0, 1, 1], [], []>} : vector<64x5xf32>, vector<5x128xf32>, vector<64x128xf32> -> vector<64x128xf32>
    %c0_3 = arith.constant 0 : index
    %c0_4 = arith.constant 0 : index
    %3 = vector.load %arg3[%c0_3, %c0_4] : memref<64x1xf32, #tpu.memory_space<vmem>>, vector<64x1xf32>
    %4 = vector.broadcast %3 : vector<64x1xf32> to vector<64x128xf32>
    %5 = arith.addf %2, %4 : vector<64x128xf32>
    %cst_5 = arith.constant 0.000000e+00 : f32
    %6 = vector.broadcast %cst_5 : f32 to vector<64x128xf32>
    %7 = arith.maximumf %5, %6 : vector<64x128xf32>
    %c0_6 = arith.constant 0 : index
    %c0_7 = arith.constant 0 : index
    %8 = vector.load %arg4[%c0_6, %c0_7] : memref<16x64xf32, #tpu.memory_space<vmem>>, vector<16x64xf32>
    %cst_8 = arith.constant dense<0.000000e+00> : vector<16x128xf32>
    %9 = tpu.matmul %8, %7, %cst_8 {dimension_numbers = #tpu.dot_dimension_numbers<[1], [0], [0], [1], [0, 0, 1, 1], [], []>} : vector<16x64xf32>, vector<64x128xf32>, vector<16x128xf32> -> vector<16x128xf32>
    %c0_9 = arith.constant 0 : index
    %c0_10 = arith.constant 0 : index
    %10 = vector.load %arg5[%c0_9, %c0_10] : memref<16x1xf32, #tpu.memory_space<vmem>>, vector<16x1xf32>
    %11 = vector.broadcast %10 : vector<16x1xf32> to vector<16x128xf32>
    %12 = arith.addf %9, %11 : vector<16x128xf32>
    %cst_11 = arith.constant 0.000000e+00 : f32
    %13 = vector.broadcast %cst_11 : f32 to vector<16x128xf32>
    %14 = arith.maximumf %12, %13 : vector<16x128xf32>
    %c0_12 = arith.constant 0 : index
    %c0_13 = arith.constant 0 : index
    %15 = vector.load %arg6[%c0_12, %c0_13] : memref<16x128xf32, #tpu.memory_space<vmem>>, vector<16x128xf32>
    tpu.vector_store %arg6[%c0_12, %c0_13], %14 {strides = array<i32>} : memref<16x128xf32, #tpu.memory_space<vmem>>, vector<16x128xf32>,
    return
  }
  func.func @transform_0(%arg0: i32) -> (i32, i32) {
    %c0_i32 = arith.constant 0 : i32
    %c0_i32_0 = arith.constant 0 : i32
    return %c0_i32, %arg0 : i32, i32
  }
  func.func @transform_1(%arg0: i32) -> (i32, i32) {
    %c0_i32 = arith.constant 0 : i32
    %c0_i32_0 = arith.constant 0 : i32
    %c0_i32_1 = arith.constant 0 : i32
    return %c0_i32, %c0_i32_0 : i32, i32
  }
  func.func @transform_2(%arg0: i32) -> (i32, i32) {
    %c0_i32 = arith.constant 0 : i32
    %c0_i32_0 = arith.constant 0 : i32
    %c0_i32_1 = arith.constant 0 : i32
    return %c0_i32, %c0_i32_0 : i32, i32
  }
  func.func @transform_3(%arg0: i32) -> (i32, i32) {
    %c0_i32 = arith.constant 0 : i32
    %c0_i32_0 = arith.constant 0 : i32
    %c0_i32_1 = arith.constant 0 : i32
    return %c0_i32, %c0_i32_0 : i32, i32
  }
  func.func @transform_4(%arg0: i32) -> (i32, i32) {
    %c0_i32 = arith.constant 0 : i32
    %c0_i32_0 = arith.constant 0 : i32
    %c0_i32_1 = arith.constant 0 : i32
    return %c0_i32, %c0_i32_0 : i32, i32
  }
  func.func @transform_5(%arg0: i32) -> (i32, i32) {
    %c0_i32 = arith.constant 0 : i32
    %c0_i32_0 = arith.constant 0 : i32
    return %c0_i32, %arg0 : i32, i32
  }
}

</mosaic_0001>

<llo_original>
// kernel: bbox_feature_extractor.1
$region0: #{bbox_feature_extractor.1}
  #allocation0 [shape = 'u32[]', space=smem, size = 0x4, offset = 0x4, fixed_abs, tag = 'smem constant byte address 0x4 - core index']
  #allocation1 [shape = 'u32[144,128]{1,0:T(1,128)}', space=vmem, size = 0x12000, scoped, tag = 'internal scratch']
  %s0 = inlined_call_operand.vmem [shape: f32[5,128], index: 0, kind: input, shape index: {}]
  %s1 = inlined_call_operand.vmem [shape: f32[64,5], index: 1, kind: input, shape index: {}]
  %s2 = inlined_call_operand.vmem [shape: f32[64,1], index: 2, kind: input, shape index: {}]
  %s3 = inlined_call_operand.vmem [shape: f32[16,64], index: 3, kind: input, shape index: {}]
  %s4 = inlined_call_operand.vmem [shape: f32[16,1], index: 4, kind: input, shape index: {}]
  %s5 = inlined_call_operand.vmem [shape: f32[16,128], index: 5, kind: output, shape index: {}]
  %s6 = sld [smem:[#allocation0]]
  $region30: #{bbox_feature_extractor.1} parent=0
    _
  %s8 = ssub.s32 1, %s6
  %s9 = scalar_select 0, %s8, %s6
  // Predicated region
  $region2: #{bbox_feature_extractor.1} parent=0 // pred_check
    _
  $region3: #{bbox_feature_extractor.1} parent=0 // pred_check_branch
    %11 = sbr.rel (0) target = $region5
  $region4: #{bbox_feature_extractor.1} parent=0 // pred_region
    _
  $region5: #{bbox_feature_extractor.1} parent=0 // pred_fallthru
    _
  // Predicated region
  $region6: #{bbox_feature_extractor.1} parent=0 // pred_check
    _
  $region7: #{bbox_feature_extractor.1} parent=0 // pred_check_branch
    %13 = sbr.rel (0) target = $region9
  $region8: #{bbox_feature_extractor.1} parent=0 // pred_region
    _
  $region9: #{bbox_feature_extractor.1} parent=0 // pred_fallthru
    _
  // Predicated region
  $region10: #{bbox_feature_extractor.1} parent=0 // pred_check
    _
  $region11: #{bbox_feature_extractor.1} parent=0 // pred_check_branch
    %15 = sbr.rel (0) target = $region13
  $region12: #{bbox_feature_extractor.1} parent=0 // pred_region
    _
  $region13: #{bbox_feature_extractor.1} parent=0 // pred_fallthru
    _
  // Predicated region
  $region14: #{bbox_feature_extractor.1} parent=0 // pred_check
    _
  $region15: #{bbox_feature_extractor.1} parent=0 // pred_check_branch
    %17 = sbr.rel (0) target = $region17
  $region16: #{bbox_feature_extractor.1} parent=0 // pred_region
    _
  $region17: #{bbox_feature_extractor.1} parent=0 // pred_fallthru
    _
  // Predicated region
  $region18: #{bbox_feature_extractor.1} parent=0 // pred_check
    _
  $region19: #{bbox_feature_extractor.1} parent=0 // pred_check_branch
    %19 = sbr.rel (0) target = $region21
  $region20: #{bbox_feature_extractor.1} parent=0 // pred_region
    _
  $region21: #{bbox_feature_extractor.1} parent=0 // pred_fallthru
    _
  %v20 = vld [vmem:[%s0] sm:$0x1f]
  %v21 = vld [vmem:[%s1] sm:$0xff]
  %v22 = vld [vmem:[%s1 + $0x8] sm:$0xff]
  %v23 = vld [vmem:[%s1 + $0x10] sm:$0xff]
  %v24 = vld [vmem:[%s1 + $0x18] sm:$0xff]
  %v25 = vld [vmem:[%s1 + $0x20] sm:$0xff]
  %v26 = vld [vmem:[%s1 + $0x28] sm:$0xff]
  %v27 = vld [vmem:[%s1 + $0x30] sm:$0xff]
  %v28 = vld [vmem:[%s1 + $0x38] sm:$0xff]
  %v29 = vld [vmem:[%s2] sm:$0xff]
  %v30 = vld [vmem:[%s2 + $0x8] sm:$0xff]
  %v31 = vld [vmem:[%s2 + $0x10] sm:$0xff]
  %v32 = vld [vmem:[%s2 + $0x18] sm:$0xff]
  %v33 = vld [vmem:[%s2 + $0x20] sm:$0xff]
  %v34 = vld [vmem:[%s2 + $0x28] sm:$0xff]
  %v35 = vld [vmem:[%s2 + $0x30] sm:$0xff]
  %v36 = vld [vmem:[%s2 + $0x38] sm:$0xff]
  %38 = vset.pattern.permute.xlu0 0
  %39 = vperm.xlu0 %38, %v29
  %v40 = vpop.permute.xlu0 %39
  %43 = vset.pattern.permute.xlu0 0
  %44 = vperm.xlu0 %43, %v30
  %v45 = vpop.permute.xlu0 %44
  %48 = vset.pattern.permute.xlu0 0
  %49 = vperm.xlu0 %48, %v31
  %v50 = vpop.permute.xlu0 %49
  %53 = vset.pattern.permute.xlu0 0
  %54 = vperm.xlu0 %53, %v32
  %v55 = vpop.permute.xlu0 %54
  %58 = vset.pattern.permute.xlu0 0
  %59 = vperm.xlu0 %58, %v33
  %v60 = vpop.permute.xlu0 %59
  %63 = vset.pattern.permute.xlu0 0
  %64 = vperm.xlu0 %63, %v34
  %v65 = vpop.permute.xlu0 %64
  %68 = vset.pattern.permute.xlu0 0
  %69 = vperm.xlu0 %68, %v35
  %v70 = vpop.permute.xlu0 %69
  %73 = vset.pattern.permute.xlu0 0
  %74 = vperm.xlu0 %73, %v36
  %v75 = vpop.permute.xlu0 %74
  %vm77 = vcmask 39936
  %v79 = vsel %vm77, %v21, 0
  %v82 = vsel %vm77, %v22, 0
  %v85 = vsel %vm77, %v23, 0
  %v88 = vsel %vm77, %v24, 0
  %v91 = vsel %vm77, %v25, 0
  %v94 = vsel %vm77, %v26, 0
  %v97 = vsel %vm77, %v27, 0
  %v100 = vsel %vm77, %v28, 0
  %vm102 = vcmask 1044480
  %v104 = vsel %vm102, %v20, 0
  %106 = vmatprep.subr.mxu0 0.0
  %107 = vmatpush1.msra.mxu0 %v104
  %108 = vmatprep.subr.mxu0 0.0
  %109 = vmatpush1.msra.mxu0 0.0
  %110 = vmatprep.subr.mxu0 0.0
  %111 = vmatpush1.msra.mxu0 0.0
  %112 = vmatprep.subr.mxu0 0.0
  %113 = vmatpush1.msra.mxu0 0.0
  %114 = vmatprep.subr.mxu0 0.0
  %115 = vmatpush1.msra.mxu0 0.0
  %116 = vmatprep.subr.mxu0 0.0
  %117 = vmatpush1.msra.mxu0 0.0
  %118 = vmatprep.subr.mxu0 0.0
  %119 = vmatpush1.msra.mxu0 0.0
  %120 = vmatprep.subr.mxu0 0.0
  %121 = vmatpush1.msra.mxu0 0.0
  %122 = vmatprep.subr.mxu0 0.0
  %123 = vmatpush1.msra.mxu0 0.0
  %124 = vmatprep.subr.mxu0 0.0
  %125 = vmatpush1.msra.mxu0 0.0
  %126 = vmatprep.subr.mxu0 0.0
  %127 = vmatpush1.msra.mxu0 0.0
  %128 = vmatprep.subr.mxu0 0.0
  %129 = vmatpush1.msra.mxu0 0.0
  %130 = vmatprep.subr.mxu0 0.0
  %131 = vmatpush1.msra.mxu0 0.0
  %132 = vmatprep.subr.mxu0 0.0
  %133 = vmatpush1.msra.mxu0 0.0
  %134 = vmatprep.subr.mxu0 0.0
  %135 = vmatpush1.msra.mxu0 0.0
  %136 = vmatprep.subr.mxu0 0.0
  %137 = vmatpush1.msra.mxu0 0.0
  %138 = vmatprep.subr.mxu0 0.0
  %139 = vmatpush1.msra.mxu0 0.0
  %140 = vmatprep.subr.mxu0 0.0
  %141 = vmatpush1.msra.mxu0 0.0
  %142 = vmatprep.subr.mxu0 0.0
  %143 = vmatpush1.msra.mxu0 0.0
  %144 = vmatprep.subr.mxu0 0.0
  %145 = vmatpush1.msra.mxu0 0.0
  %146 = vmatprep.subr.mxu0 0.0
  %147 = vmatpush1.msra.mxu0 0.0
  %148 = vmatprep.subr.mxu0 0.0
  %149 = vmatpush1.msra.mxu0 0.0
  %150 = vmatprep.subr.mxu0 0.0
  %151 = vmatpush1.msra.mxu0 0.0
  %152 = vmatprep.subr.mxu0 0.0
  %153 = vmatpush1.msra.mxu0 0.0
  %154 = vmatprep.subr.mxu0 0.0
  %155 = vmatpush1.msra.mxu0 0.0
  %156 = vmatprep.subr.mxu0 0.0
  %157 = vmatpush1.msra.mxu0 0.0
  %158 = vmatprep.subr.mxu0 0.0
  %159 = vmatpush1.msra.mxu0 0.0
  %160 = vmatprep.subr.mxu0 0.0
  %161 = vmatpush1.msra.mxu0 0.0
  %162 = vmatprep.subr.mxu0 0.0
  %163 = vmatpush1.msra.mxu0 0.0
  %164 = vmatprep.subr.mxu0 0.0
  %165 = vmatpush1.msra.mxu0 0.0
  %166 = vmatprep.subr.mxu0 0.0
  %167 = vmatpush1.msra.mxu0 0.0
  %168 = vmatprep.subr.mxu0 0.0
  %169 = vmatpush1.msra.mxu0 0.0
  %170 = vmatprep.mubr.f32.mxu0 0.0
  %171 = vmatmul.mubr.f32.gmra.mrb[0].mxu0 %v79
  %v172 = vpop.f32.mrb[0].mxu0
  %v173 = vadd.f32 %v40, %v172
  %v174 = vpop.f32.mrb[0].mxu0
  %175 = vmatprep.mubr.f32.mxu0 0.0
  %176 = vmatmul.mubr.f32.gmra.mrb[0].mxu0 %v82
  %v177 = vpop.f32.mrb[0].mxu0
  %v178 = vadd.f32 %v45, %v177
  %v179 = vpop.f32.mrb[0].mxu0
  %180 = vmatprep.mubr.f32.mxu0 0.0
  %181 = vmatmul.mubr.f32.gmra.mrb[0].mxu0 %v85
  %v182 = vpop.f32.mrb[0].mxu0
  %v183 = vadd.f32 %v50, %v182
  %v184 = vpop.f32.mrb[0].mxu0
  %185 = vmatprep.mubr.f32.mxu0 0.0
  %186 = vmatmul.mubr.f32.gmra.mrb[0].mxu0 %v88
  %v187 = vpop.f32.mrb[0].mxu0
  %v188 = vadd.f32 %v55, %v187
  %v189 = vpop.f32.mrb[0].mxu0
  %190 = vmatprep.mubr.f32.mxu0 0.0
  %191 = vmatmul.mubr.f32.gmra.mrb[0].mxu0 %v91
  %v192 = vpop.f32.mrb[0].mxu0
  %v193 = vadd.f32 %v60, %v192
  %v194 = vpop.f32.mrb[0].mxu0
  %195 = vmatprep.mubr.f32.mxu0 0.0
  %196 = vmatmul.mubr.f32.gmra.mrb[0].mxu0 %v94
  %v197 = vpop.f32.mrb[0].mxu0
  %v198 = vadd.f32 %v65, %v197
  %v199 = vpop.f32.mrb[0].mxu0
  %200 = vmatprep.mubr.f32.mxu0 0.0
  %201 = vmatmul.mubr.f32.gmra.mrb[0].mxu0 %v97
  %v202 = vpop.f32.mrb[0].mxu0
  %v203 = vadd.f32 %v70, %v202
  %v204 = vpop.f32.mrb[0].mxu0
  %205 = vmatprep.mubr.f32.mxu0 0.0
  %206 = vmatmul.mubr.f32.gmra.mrb[0].mxu0 %v100
  %v207 = vpop.f32.mrb[0].mxu0
  %v208 = vadd.f32 %v75, %v207
  %v209 = vpop.f32.mrb[0].mxu0
  %210 = vdwg.mxu0
  %v211 = vmax.f32 %v173, 0.0
  %v212 = vmax.f32 %v178, 0.0
  %v213 = vmax.f32 %v183, 0.0
  %v214 = vmax.f32 %v188, 0.0
  %v215 = vmax.f32 %v193, 0.0
  %v216 = vmax.f32 %v198, 0.0
  %v217 = vmax.f32 %v203, 0.0
  %v218 = vmax.f32 %v208, 0.0
  %v219 = vld [vmem:[%s3] sm:$0xff]
  %v220 = vld [vmem:[%s3 + $0x8] sm:$0xff]
  %v221 = vld [vmem:[%s4] sm:$0xff]
  %v222 = vld [vmem:[%s4 + $0x8] sm:$0xff]
  %224 = vset.pattern.permute.xlu0 0
  %225 = vperm.xlu0 %224, %v221
  %v226 = vpop.permute.xlu0 %225
  %229 = vset.pattern.permute.xlu0 0
  %230 = vperm.xlu0 %229, %v222
  %v231 = vpop.permute.xlu0 %230
  %vm233 = vcmask 523264
  %v235 = vsel %vm233, %v219, 0
  %v238 = vsel %vm233, %v220, 0
  %240 = vmatprep.subr.mxu0 0.0
  %241 = vmatpush1.msra.mxu0 %v211
  %242 = vmatprep.subr.mxu0 0.0
  %243 = vmatpush1.msra.mxu0 %v212
  %244 = vmatprep.subr.mxu0 0.0
  %245 = vmatpush1.msra.mxu0 %v213
  %246 = vmatprep.subr.mxu0 0.0
  %247 = vmatpush1.msra.mxu0 %v214
  %248 = vmatprep.subr.mxu0 0.0
  %249 = vmatpush1.msra.mxu0 %v215
  %250 = vmatprep.subr.mxu0 0.0
  %251 = vmatpush1.msra.mxu0 %v216
  %252 = vmatprep.subr.mxu0 0.0
  %253 = vmatpush1.msra.mxu0 %v217
  %254 = vmatprep.subr.mxu0 0.0
  %255 = vmatpush1.msra.mxu0 %v218
  %256 = vmatprep.subr.mxu0 0.0
  %257 = vmatpush1.msra.mxu0 0.0
  %258 = vmatprep.subr.mxu0 0.0
  %259 = vmatpush1.msra.mxu0 0.0
  %260 = vmatprep.subr.mxu0 0.0
  %261 = vmatpush1.msra.mxu0 0.0
  %262 = vmatprep.subr.mxu0 0.0
  %263 = vmatpush1.msra.mxu0 0.0
  %264 = vmatprep.subr.mxu0 0.0
  %265 = vmatpush1.msra.mxu0 0.0
  %266 = vmatprep.subr.mxu0 0.0
  %267 = vmatpush1.msra.mxu0 0.0
  %268 = vmatprep.subr.mxu0 0.0
  %269 = vmatpush1.msra.mxu0 0.0
  %270 = vmatprep.subr.mxu0 0.0
  %271 = vmatpush1.msra.mxu0 0.0
  %272 = vmatprep.subr.mxu0 0.0
  %273 = vmatpush1.msra.mxu0 0.0
  %274 = vmatprep.subr.mxu0 0.0
  %275 = vmatpush1.msra.mxu0 0.0
  %276 = vmatprep.subr.mxu0 0.0
  %277 = vmatpush1.msra.mxu0 0.0
  %278 = vmatprep.subr.mxu0 0.0
  %279 = vmatpush1.msra.mxu0 0.0
  %280 = vmatprep.subr.mxu0 0.0
  %281 = vmatpush1.msra.mxu0 0.0
  %282 = vmatprep.subr.mxu0 0.0
  %283 = vmatpush1.msra.mxu0 0.0
  %284 = vmatprep.subr.mxu0 0.0
  %285 = vmatpush1.msra.mxu0 0.0
  %286 = vmatprep.subr.mxu0 0.0
  %287 = vmatpush1.msra.mxu0 0.0
  %288 = vmatprep.subr.mxu0 0.0
  %289 = vmatpush1.msra.mxu0 0.0
  %290 = vmatprep.subr.mxu0 0.0
  %291 = vmatpush1.msra.mxu0 0.0
  %292 = vmatprep.subr.mxu0 0.0
  %293 = vmatpush1.msra.mxu0 0.0
  %294 = vmatprep.subr.mxu0 0.0
  %295 = vmatpush1.msra.mxu0 0.0
  %296 = vmatprep.subr.mxu0 0.0
  %297 = vmatpush1.msra.mxu0 0.0
  %298 = vmatprep.subr.mxu0 0.0
  %299 = vmatpush1.msra.mxu0 0.0
  %300 = vmatprep.subr.mxu0 0.0
  %301 = vmatpush1.msra.mxu0 0.0
  %302 = vmatprep.subr.mxu0 0.0
  %303 = vmatpush1.msra.mxu0 0.0
  %304 = vmatprep.mubr.f32.mxu0 0.0
  %305 = vmatmul.mubr.f32.gmra.mrb[0].mxu0 %v235
  %v306 = vpop.f32.mrb[0].mxu0
  %v307 = vadd.f32 %v226, %v306
  %v308 = vpop.f32.mrb[0].mxu0
  %309 = vmatprep.mubr.f32.mxu0 0.0
  %310 = vmatmul.mubr.f32.gmra.mrb[0].mxu0 %v238
  %v311 = vpop.f32.mrb[0].mxu0
  %v312 = vadd.f32 %v231, %v311
  %v313 = vpop.f32.mrb[0].mxu0
  %314 = vdwg.mxu0
  %v315 = vmax.f32 %v307, 0.0
  %v316 = vmax.f32 %v312, 0.0
  %317 = vst [vmem:[%s5] sm:$0xff] %v315
  %318 = vst [vmem:[%s5 + $0x8] sm:$0xff] %v316
  // Predicated region
  $region22: #{bbox_feature_extractor.1} parent=0 // pred_check
    _
  $region23: #{bbox_feature_extractor.1} parent=0 // pred_check_branch
    %320 = sbr.rel (0) target = $region25
  $region24: #{bbox_feature_extractor.1} parent=0 // pred_region
    _
  $region25: #{bbox_feature_extractor.1} parent=0 // pred_fallthru
    _
  // Predicated region
  $region26: #{bbox_feature_extractor.1} parent=0 // pred_check
    _
  $region27: #{bbox_feature_extractor.1} parent=0 // pred_check_branch
    %322 = sbr.rel (0) target = $region29
  $region28: #{bbox_feature_extractor.1} parent=0 // pred_region
    _
  $region29: #{bbox_feature_extractor.1} parent=0 // pred_fallthru
    _

</llo_original>
